<compile_context>
chip_gen: v6e
topology: v6e:2x2x1
jax: 0.10.0
libtpu: 0.0.40
codegen_flags: <defaults>
</compile_context>

<pallas_src>
import functools

import jax
import jax.numpy as jnp
from jax import lax
from jax.experimental import pallas as pl
from jax.experimental.pallas import tpu as pltpu


def _proxynca_loss_math(labels, b, p, *, scale, dim):
    """labels (B,1) int32 in [0,C); b (B,D) f32; p (C,D) f32 -> scalar f32."""
    B = b.shape[0]
    C = p.shape[0]

    # scale * F.normalize(x, dim=1) == x * scale * rsqrt(max(||x||^2, 1e-24))
    b_inv = lax.rsqrt(jnp.maximum(jnp.sum(b * b, axis=-1, keepdims=True), 1e-24))
    p_inv = lax.rsqrt(jnp.maximum(jnp.sum(p * p, axis=-1, keepdims=True), 1e-24))
    bn = b * (scale * b_inv)                      # (B, D), ||bn_i|| == scale
    # ||bn_i - pn_c||^2 = 2*scale^2 - 2<bn_i, pn_c>; the 2*scale^2 constant
    # cancels in every loss branch.  Fold the 2x into the (already present)
    # proxy scale multiply -> no post-matmul multiply on the MXU result path.
    pn = p * ((2.0 * scale) * p_inv)              # (C, D)
    # Contract on the shared last dim (A @ B.T form) so no pn transpose /
    # relayout is materialized before the MXU push.
    logits = lax.dot_general(
        bn, pn, dimension_numbers=(((1,), (1,)), ((), ())),
        preferred_element_type=jnp.float32)       # (B, C) == 2<bn_i, pn_true_c>

    class_ids = lax.broadcasted_iota(jnp.int32, (B, C), 1)      # (B, C)
    pos_mask = class_ids == labels                               # (B, C)
    # mean_i(positive logit) == full masked sum / B: single reduce, no per-row
    # lane reduction in the epilogue.
    pos_mean = jnp.sum(jnp.where(pos_mask, logits, 0.0)) * (1.0 / B)

    if dim == 0:
        # Reference column ordering of the negatives: column j of row i holds
        # class j if j < label_i, else class j+1 (exactly C-1 columns).
        # Build it from two lane-offset views of logits (one-lane shift on the
        # XLU) instead of a constant (C,C) shift matmul: no second MXU
        # round-trip, no garbage wraparound column to mask.
        left = logits[:, : C - 1]                 # class j
        right = logits[:, 1:]                     # class j + 1
        col_ids = lax.broadcasted_iota(jnp.int32, (B, C - 1), 1)
        neg = jnp.where(col_ids < labels, left, right)           # (B, C-1)
        m = jnp.max(neg, axis=0, keepdims=True)                  # (1, C-1)
        lse = m + jnp.log(jnp.sum(jnp.exp(neg - m), axis=0, keepdims=True))
        lse_mean = jnp.sum(lse) * (1.0 / (C - 1))
    else:
        # Row-wise logsumexp over the C-1 negatives (positive column -> -inf).
        neg = jnp.where(pos_mask, -jnp.inf, logits)              # (B, C)
        m = jnp.max(neg, axis=-1, keepdims=True)                 # (B, 1) finite
        lse = m + jnp.log(jnp.sum(jnp.exp(neg - m), axis=-1, keepdims=True))
        lse_mean = jnp.sum(lse) * (1.0 / B)

    # dim==1: mean(lse_row - pos_row) == mean(lse_row) - mean(pos_row);
    # dim==0/2 are already the difference of the two means, so one formula
    # covers all branches (the 2*scale^2 constant cancelled throughout).
    return lse_mean - pos_mean


def _proxynca_kernel_single(labels_ref, emb_ref, loss_ref, *, n_batch, scale, dim):
    # emb_ref = [batch ; proxies] concatenated at the call site (2 DMAs not 3).
    emb = emb_ref[...]                            # (B + C, D) f32
    b = emb[:n_batch]
    p = emb[n_batch:]
    loss_ref[0] = _proxynca_loss_math(labels_ref[...], b, p, scale=scale, dim=dim)


def _proxynca_kernel_batched(labels_ref, batch_ref, prox_ref, loss_ref, *, scale, dim):
    loss = _proxynca_loss_math(labels_ref[...], batch_ref[...], prox_ref[...],
                               scale=scale, dim=dim)
    loss_ref[...] = jnp.broadcast_to(loss, (1, 1))


def _cost(n_eval, B, C, D):
    flops = n_eval * (2 * B * C * D + 4 * (B + C) * D + 10 * B * C)
    transcendentals = n_eval * (B * C + B + 2 * C)
    bytes_accessed = n_eval * ((B * D + B) * 4 + 4) + C * D * 4
    return pl.CostEstimate(flops=int(flops),
                           transcendentals=int(transcendentals),
                           bytes_accessed=int(bytes_accessed))


def proxynca_loss(batch, labels, proxies, *, scale=3.0, dim=1):
    """One loss evaluation.  batch (B,D) f32, labels (B,) int, proxies (C,D) f32."""
    B, D = batch.shape
    C, Dp = proxies.shape
    assert D == Dp
    if C < 2:
        raise ValueError("ProxyNCA requires at least 2 classes (one negative per row).")
    labels2d = labels.astype(jnp.int32).reshape(B, 1)
    emb = jnp.concatenate([batch.astype(jnp.float32),
                           proxies.astype(jnp.float32)], axis=0)   # (B+C, D)
    kernel = functools.partial(_proxynca_kernel_single,
                               n_batch=B, scale=float(scale), dim=int(dim))
    out = pl.pallas_call(
        kernel,
        out_shape=jax.ShapeDtypeStruct((1,), jnp.float32),
        in_specs=[
            pl.BlockSpec(memory_space=pltpu.MemorySpace.VMEM),   # labels (B,1) i32
            pl.BlockSpec(memory_space=pltpu.MemorySpace.VMEM),   # [batch; proxies]
        ],
        out_specs=pl.BlockSpec(memory_space=pltpu.MemorySpace.SMEM),  # scalar, no padded vst
        cost_estimate=_cost(1, B, C, D),
    )(labels2d, emb)
    return out[0]


def proxynca_loss_batched(batches, labels, proxies, *, scale=3.0, dim=1):
    """N loss evaluations in ONE pallas_call (amortizes launch/DMA overhead).

    batches (N,B,D) f32, labels (N,B) int, proxies (C,D) f32 -> (N,) f32.
    The leading grid axis is 'parallel' so v7x shards it across both TCs.
    """
    N, B, D = batches.shape
    C, Dp = proxies.shape
    assert D == Dp
    if C < 2:
        raise ValueError("ProxyNCA requires at least 2 classes (one negative per row).")
    labels3d = labels.astype(jnp.int32).reshape(N, B, 1)
    kernel = functools.partial(_proxynca_kernel_batched,
                               scale=float(scale), dim=int(dim))
    out = pl.pallas_call(
        kernel,
        out_shape=jax.ShapeDtypeStruct((N, 1, 1), jnp.float32),
        grid=(N,),
        in_specs=[
            pl.BlockSpec((None, B, 1), lambda n: (n, 0, 0)),   # labels slab
            pl.BlockSpec((None, B, D), lambda n: (n, 0, 0)),   # batch slab
            pl.BlockSpec((C, D), lambda n: (0, 0)),            # proxies (resident)
        ],
        out_specs=pl.BlockSpec((None, 1, 1), lambda n: (n, 0, 0)),
        compiler_params=pltpu.CompilerParams(dimension_semantics=("parallel",)),
        cost_estimate=_cost(N, B, C, D),
    )(labels3d, batches.astype(jnp.float32), proxies.astype(jnp.float32))
    return out.reshape(N)


if __name__ == "__main__":
    # opt-like hyperparameters (deterministic, in-script).
    n_classes = 16       # opt.n_classes (num_proxies)
    embed_dim = 32       # opt.embed_dim
    batch_size = 8
    n_eval = 4           # number of loss evaluations batched into one call
    scale = 3.0          # opt.loss_proxynca_scale

    key = jax.random.PRNGKey(0)
    k_batch, k_proxy, k_lab = jax.random.split(key, 3)

    batches = jax.random.normal(k_batch, (n_eval, batch_size, embed_dim),
                                dtype=jnp.float32)
    # torch.randn(num_proxies, embed_dim) / 8
    proxies = jax.random.normal(k_proxy, (n_classes, embed_dim),
                                dtype=jnp.float32) / 8.0
    labels = jax.random.randint(k_lab, (n_eval, batch_size), 0, n_classes,
                                dtype=jnp.int32)

    # Single-evaluation path (module forward): default dim==1 plus the
    # dim==2 and dim==0 variants of the reference forward.
    single = [proxynca_loss(batches[0], labels[0], proxies, scale=scale, dim=d)
              for d in (1, 2, 0)]
    # Batched path: n_eval evaluations in one pallas_call (default dim==1).
    batched = proxynca_loss_batched(batches, labels, proxies, scale=scale, dim=1)

    jax.block_until_ready((single, batched))
    print("KERNEL_OK")
</pallas_src>

<mosaic_0001>
module attributes {stable_mosaic.version = 11 : i64} {
  func.func @_proxynca_kernel_single(%arg0: memref<8x1xi32, #tpu.memory_space<vmem>>, %arg1: memref<24x32xf32, #tpu.memory_space<vmem>>, %arg2: memref<1xf32, #tpu.memory_space<smem>>) attributes {dimension_semantics = [], scalar_prefetch = 0 : i64, scratch_operands = 0 : i64, tpu.core_type = #tpu.core_type<tc>} {
    %c0 = arith.constant 0 : index
    %c0_0 = arith.constant 0 : index
    %0 = vector.load %arg1[%c0, %c0_0] : memref<24x32xf32, #tpu.memory_space<vmem>>, vector<24x32xf32>
    %1 = vector.extract_strided_slice %0 {offsets = [0, 0], sizes = [8, 32], strides = [1, 1]} : vector<24x32xf32> to vector<8x32xf32>
    %2 = vector.extract_strided_slice %0 {offsets = [8, 0], sizes = [16, 32], strides = [1, 1]} : vector<24x32xf32> to vector<16x32xf32>
    %c0_1 = arith.constant 0 : index
    %c0_2 = arith.constant 0 : index
    %3 = vector.load %arg0[%c0_1, %c0_2] : memref<8x1xi32, #tpu.memory_space<vmem>>, vector<8x1xi32>
    %4 = arith.mulf %1, %1 : vector<8x32xf32>
    %cst = arith.constant dense<0.000000e+00> : vector<8xf32>
    %5 = vector.multi_reduction <add>, %4, %cst [1] : vector<8x32xf32> to vector<8xf32>
    %6 = vector.shape_cast %5 : vector<8xf32> to vector<8x1xf32>
    %cst_3 = arith.constant 1.000000e-24 : f32
    %7 = vector.broadcast %cst_3 : f32 to vector<8x1xf32>
    %8 = arith.maximumf %6, %7 : vector<8x1xf32>
    %9 = math.rsqrt %8 : vector<8x1xf32>
    %10 = arith.mulf %2, %2 : vector<16x32xf32>
    %cst_4 = arith.constant dense<0.000000e+00> : vector<16xf32>
    %11 = vector.multi_reduction <add>, %10, %cst_4 [1] : vector<16x32xf32> to vector<16xf32>
    %12 = vector.shape_cast %11 : vector<16xf32> to vector<16x1xf32>
    %cst_5 = arith.constant 1.000000e-24 : f32
    %13 = vector.broadcast %cst_5 : f32 to vector<16x1xf32>
    %14 = arith.maximumf %12, %13 : vector<16x1xf32>
    %15 = math.rsqrt %14 : vector<16x1xf32>
    %cst_6 = arith.constant 3.000000e+00 : f32
    %16 = vector.broadcast %cst_6 : f32 to vector<8x1xf32>
    %17 = arith.mulf %16, %9 : vector<8x1xf32>
    %18 = vector.broadcast %17 : vector<8x1xf32> to vector<8x32xf32>
    %19 = arith.mulf %1, %18 : vector<8x32xf32>
    %cst_7 = arith.constant 6.000000e+00 : f32
    %20 = vector.broadcast %cst_7 : f32 to vector<16x1xf32>
    %21 = arith.mulf %20, %15 : vector<16x1xf32>
    %22 = vector.broadcast %21 : vector<16x1xf32> to vector<16x32xf32>
    %23 = arith.mulf %2, %22 : vector<16x32xf32>
    %cst_8 = arith.constant dense<0.000000e+00> : vector<8x16xf32>
    %24 = tpu.matmul %19, %23, %cst_8 {dimension_numbers = #tpu.dot_dimension_numbers<[1], [1], [0], [0], [0, 0, 1, 0], [], []>} : vector<8x32xf32>, vector<16x32xf32>, vector<8x16xf32> -> vector<8x16xf32>
    %25 = tpu.iota {dimensions = array<i32: 1>} : vector<8x16xi32>
    %26 = vector.broadcast %3 : vector<8x1xi32> to vector<8x16xi32>
    %27 = arith.cmpi eq, %25, %26 : vector<8x16xi32>
    %cst_9 = arith.constant 0.000000e+00 : f32
    %28 = vector.broadcast %cst_9 : f32 to vector<8x16xf32>
    %29 = arith.select %27, %24, %28 : vector<8x16xi1>, vector<8x16xf32>
    %30 = vector.shape_cast %29 : vector<8x16xf32> to vector<1x8x16xf32>
    %cst_10 = arith.constant dense<0.000000e+00> : vector<1xf32>
    %31 = vector.multi_reduction <add>, %30, %cst_10 [1, 2] : vector<1x8x16xf32> to vector<1xf32>
    %32 = vector.shape_cast %31 : vector<1xf32> to vector<1x1x1xf32>
    %33 = vector.extract %32[0, 0, 0] : f32 from vector<1x1x1xf32>
    %cst_11 = arith.constant 1.250000e-01 : f32
    %34 = arith.mulf %33, %cst_11 : f32
    %cst_12 = arith.constant 0xFF800000 : f32
    %35 = vector.broadcast %cst_12 : f32 to vector<8x16xf32>
    %36 = arith.select %27, %35, %24 : vector<8x16xi1>, vector<8x16xf32>
    %cst_13 = arith.constant dense<0xFF800000> : vector<8xf32>
    %37 = vector.multi_reduction <maximumf>, %36, %cst_13 [1] : vector<8x16xf32> to vector<8xf32>
    %38 = vector.shape_cast %37 : vector<8xf32> to vector<8x1xf32>
    %39 = vector.broadcast %38 : vector<8x1xf32> to vector<8x16xf32>
    %40 = arith.subf %36, %39 : vector<8x16xf32>
    %41 = math.exp %40 : vector<8x16xf32>
    %cst_14 = arith.constant dense<0.000000e+00> : vector<8xf32>
    %42 = vector.multi_reduction <add>, %41, %cst_14 [1] : vector<8x16xf32> to vector<8xf32>
    %43 = vector.shape_cast %42 : vector<8xf32> to vector<8x1xf32>
    %44 = math.log %43 : vector<8x1xf32>
    %45 = arith.addf %38, %44 : vector<8x1xf32>
    %46 = vector.shape_cast %45 : vector<8x1xf32> to vector<1x8x1xf32>
    %cst_15 = arith.constant dense<0.000000e+00> : vector<1xf32>
    %47 = vector.multi_reduction <add>, %46, %cst_15 [1, 2] : vector<1x8x1xf32> to vector<1xf32>
    %48 = vector.shape_cast %47 : vector<1xf32> to vector<1x1x1xf32>
    %49 = vector.extract %48[0, 0, 0] : f32 from vector<1x1x1xf32>
    %cst_16 = arith.constant 1.250000e-01 : f32
    %50 = arith.mulf %49, %cst_16 : f32
    %51 = arith.subf %50, %34 : f32
    %c0_17 = arith.constant 0 : index
    %52 = memref.load %arg2[%c0_17] : memref<1xf32, #tpu.memory_space<smem>>
    memref.store %51, %arg2[%c0_17] : memref<1xf32, #tpu.memory_space<smem>>
    return
  }
}

</mosaic_0001>

<llo_original>
// kernel: tpu_custom_call.1
$region0: #{tpu_custom_call.1}
  #allocation0 [shape = 'u32[]', space=smem, size = 0x4, offset = 0x4, fixed_abs, tag = 'smem constant byte address 0x4 - core index']
  #allocation1 [shape = 'u32[144,128]{1,0:T(1,128)}', space=vmem, size = 0x12000, scoped, tag = 'internal scratch']
  %s0 = inlined_call_operand.vmem [shape: s32[8,1], index: 0, kind: input, shape index: {}]
  %s1 = inlined_call_operand.hbm [shape: f32[24,32], index: 1, kind: input, shape index: {}]
  %s2 = inlined_call_operand.hbm [shape: f32[1], index: 2, kind: output, shape index: {}]
  %s3 = sld [smem:[#allocation0]]
  $region22: #{tpu_custom_call.1} parent=0
    _
  %s5 = ssub.s32 1, %s3
  %s6 = scalar_select 0, %s5, %s3
  $region1: #{tpu_custom_call.1} parent=0
    #allocation2 [shape = 'u8[12288]{0}', space=vmem, size = 0x3000, scoped, tag = 'input window, operand 1, single buffered']
    #allocation3 [shape = 's32[1]{0}', space=sflag, size = 0x4, scoped, tag = 'scoped memory for tpu_custom_call.1']
    #allocation4 [shape = 's32[1]{0}', space=sflag, size = 0x4, scoped, tag = 'scoped memory for tpu_custom_call.1']
    #allocation5 [shape = 'u8[512]{0}', space=smem, size = 0x200, scoped, tag = 'output window, operand 0, single buffered']
    %7 = vsyncpa [#allocation3], 0
    %8 = vsyncpa [#allocation4], 0
    // Predicated region
    $region2: #{tpu_custom_call.1} parent=1 // pred_check
      _
    $region3: #{tpu_custom_call.1} parent=1 // pred_check_branch
      %10 = sbr.rel (0) target = $region5
    $region4: #{tpu_custom_call.1} parent=1 // pred_region
      _
    $region5: #{tpu_custom_call.1} parent=1 // pred_fallthru
      _
    // Predicated region
    $region6: #{tpu_custom_call.1} parent=1 // pred_check
      _
    $region7: #{tpu_custom_call.1} parent=1 // pred_check_branch
      %12 = sbr.rel (0) target = $region9
    $region8: #{tpu_custom_call.1} parent=1 // pred_region
      %s14 = ssub.s32 384, 384
      %15 = vsyncadd [#allocation3], %s14
      %s16 = sshll.u32 [#allocation2], 4
      %s17 = int_to_ptr.vmem [resolvable:$true] %s16
      %22 = dma.hbm_to_vmem [thread:$0]  %s1, 384, %s17, [#allocation3], 128, 128, 8
    $region9: #{tpu_custom_call.1} parent=1 // pred_fallthru
      _
    // Predicated region
    $region10: #{tpu_custom_call.1} parent=1 // pred_check
      _
    $region11: #{tpu_custom_call.1} parent=1 // pred_check_branch
      %24 = sbr.rel (0) target = $region13
    $region12: #{tpu_custom_call.1} parent=1 // pred_region
      %25 = dma.done [#allocation3], 384
    $region13: #{tpu_custom_call.1} parent=1 // pred_fallthru
      _
    %v26 = vld [vmem:[#allocation2] sm:$0xff]
    %v27 = vld [vmem:[#allocation2 + $0x8] sm:$0xff]
    %v28 = vld [vmem:[#allocation2 + $0x10] sm:$0xff]
    %v29 = vld [vmem:[%s0] sm:$0xff]
    %v30 = vmul.f32 %v26, %v26
    %vm31 = vcmask 261120
    %v32 = vsel %vm31, %v30, 0.0
    %33 = vadd.xlane.f32.xlu0 %v32
    %v34 = vpop.xlane.xlu0 %33
    %v35 = vmax.f32 %v34, 1e-24
    %v36 = vrsqrt.pop %v35
    %v37 = vmul.f32 %v27, %v27
    %v38 = vmul.f32 %v28, %v28
    %v39 = vsel %vm31, %v37, 0.0
    %40 = vadd.xlane.f32.xlu0 %v39
    %v41 = vpop.xlane.xlu0 %40
    %v42 = vsel %vm31, %v38, 0.0
    %43 = vadd.xlane.f32.xlu0 %v42
    %v44 = vpop.xlane.xlu0 %43
    %v45 = vmax.f32 %v41, 1e-24
    %v46 = vmax.f32 %v44, 1e-24
    %v47 = vrsqrt.pop %v45
    %v48 = vrsqrt.pop %v46
    %v49 = vmul.f32 %v36, 3.0
    %v50 = vmul.f32 %v26, %v49
    %v51 = vmul.f32 %v47, 6.0
    %v52 = vmul.f32 %v48, 6.0
    %v53 = vmul.f32 %v27, %v51
    %v54 = vmul.f32 %v28, %v52
    %v56 = vsel %vm31, %v50, 0
    %v59 = vsel %vm31, %v53, 0
    %v62 = vsel %vm31, %v54, 0
    %64 = vmatprep.subr.mxu0 0.0
    %65 = vmatpush1.xpose.msra.mxu0 0.0
    %66 = vmatprep.subr.mxu0 0.0
    %67 = vmatpush1.xpose.msra.mxu0 0.0
    %68 = vmatprep.subr.mxu0 0.0
    %69 = vmatpush1.xpose.msra.mxu0 0.0
    %70 = vmatprep.subr.mxu0 0.0
    %71 = vmatpush1.xpose.msra.mxu0 0.0
    %72 = vmatprep.subr.mxu0 0.0
    %73 = vmatpush1.xpose.msra.mxu0 0.0
    %74 = vmatprep.subr.mxu0 0.0
    %75 = vmatpush1.xpose.msra.mxu0 0.0
    %76 = vmatprep.subr.mxu0 0.0
    %77 = vmatpush1.xpose.msra.mxu0 0.0
    %78 = vmatprep.subr.mxu0 0.0
    %79 = vmatpush1.xpose.msra.mxu0 0.0
    %80 = vmatprep.subr.mxu0 0.0
    %81 = vmatpush1.xpose.msra.mxu0 0.0
    %82 = vmatprep.subr.mxu0 0.0
    %83 = vmatpush1.xpose.msra.mxu0 0.0
    %84 = vmatprep.subr.mxu0 0.0
    %85 = vmatpush1.xpose.msra.mxu0 0.0
    %86 = vmatprep.subr.mxu0 0.0
    %87 = vmatpush1.xpose.msra.mxu0 0.0
    %88 = vmatprep.subr.mxu0 0.0
    %89 = vmatpush1.xpose.msra.mxu0 0.0
    %90 = vmatprep.subr.mxu0 0.0
    %91 = vmatpush1.xpose.msra.mxu0 0.0
    %92 = vmatprep.subr.mxu0 0.0
    %93 = vmatpush1.xpose.msra.mxu0 %v62
    %94 = vmatprep.subr.mxu0 0.0
    %95 = vmatpush1.xpose.msra.mxu0 %v59
    %96 = vmatprep.subr.mxu0 0.0
    %97 = vmatpush2.xpose.msra.mxu0 0.0
    %98 = vmatprep.subr.mxu0 0.0
    %99 = vmatpush2.xpose.msra.mxu0 0.0
    %100 = vmatprep.subr.mxu0 0.0
    %101 = vmatpush2.xpose.msra.mxu0 0.0
    %102 = vmatprep.subr.mxu0 0.0
    %103 = vmatpush2.xpose.msra.mxu0 0.0
    %104 = vmatprep.subr.mxu0 0.0
    %105 = vmatpush2.xpose.msra.mxu0 0.0
    %106 = vmatprep.subr.mxu0 0.0
    %107 = vmatpush2.xpose.msra.mxu0 0.0
    %108 = vmatprep.subr.mxu0 0.0
    %109 = vmatpush2.xpose.msra.mxu0 0.0
    %110 = vmatprep.subr.mxu0 0.0
    %111 = vmatpush2.xpose.msra.mxu0 0.0
    %112 = vmatprep.subr.mxu0 0.0
    %113 = vmatpush2.xpose.msra.mxu0 0.0
    %114 = vmatprep.subr.mxu0 0.0
    %115 = vmatpush2.xpose.msra.mxu0 0.0
    %116 = vmatprep.subr.mxu0 0.0
    %117 = vmatpush2.xpose.msra.mxu0 0.0
    %118 = vmatprep.subr.mxu0 0.0
    %119 = vmatpush2.xpose.msra.mxu0 0.0
    %120 = vmatprep.subr.mxu0 0.0
    %121 = vmatpush2.xpose.msra.mxu0 0.0
    %122 = vmatprep.subr.mxu0 0.0
    %123 = vmatpush2.xpose.msra.mxu0 0.0
    %124 = vmatprep.subr.mxu0 0.0
    %125 = vmatpush2.xpose.msra.mxu0 0.0
    %126 = vmatprep.subr.mxu0 0.0
    %127 = vmatpush2.xpose.msra.mxu0 0.0
    %128 = vmatprep.mubr.f32.mxu0 0.0
    %129 = vmatmul.mubr.f32.gmra.mxu0 %v56
    %v130 = vpop.f32.mrf.mxu0
    %v131 = vadd.f32 0.0, %v130
    %v132 = vpop.f32.mrf.mxu0
    %133 = vdwg.mxu0
    %v134 = vlaneseq
    %v135 = vand.u32 %v134, 127
    %136 = vset.pattern.permute.xlu0 0
    %137 = vperm.xlu0 %136, %v29
    %v138 = vpop.permute.xlu0 %137
    %vm139 = vcmp.eq.s32.totalorder %v135, %v138
    %v140 = vsel %vm139, %v131, 0.0
    %vm141 = vcmask 130048
    %v142 = vsel %vm141, %v140, 0.0
    %143 = vadd.xlane.f32.xlu0 %v142
    %v144 = vpop.xlane.xlu0 %143
    %v145 = vrot.slane %v144, 4
    %v146 = vadd.f32 %v144, %v145
    %v147 = vrot.slane %v146, 2
    %v148 = vadd.f32 %v146, %v147
    %v149 = vrot.slane %v148, 1
    %v150 = vadd.f32 %v148, %v149
    %s151 = vtos %v150
    %s152 = smul.f32 %s151, 0.125
    %v153 = vsel %vm139, -inf, %v131
    %v154 = vsel %vm141, %v153, -inf
    %155 = vmax.xlane.f32.xlu0 %v154
    %v156 = vpop.xlane.xlu0 %155
    %v157 = vsub.f32 %v153, %v156
    %v158 = vmul.f32 %v157, 1.442695
    %v159 = vpow.pop %v158
    %v160 = vsel %vm141, %v159, 0.0
    %161 = vadd.xlane.f32.xlu0 %v160
    %v162 = vpop.xlane.xlu0 %161
    %v163 = vlog2.pop %v162
    %v164 = vmul.f32 %v163, 0.6931472
    %v165 = vadd.f32 %v156, %v164
    %vm166 = vcmask 7168
    %v167 = vsel %vm166, %v165, 0.0
    %168 = vadd.xlane.f32.xlu0 %v167
    %v169 = vpop.xlane.xlu0 %168
    %v170 = vrot.slane %v169, 4
    %v171 = vadd.f32 %v169, %v170
    %v172 = vrot.slane %v171, 2
    %v173 = vadd.f32 %v171, %v172
    %v174 = vrot.slane %v173, 1
    %v175 = vadd.f32 %v173, %v174
    %s176 = vtos %v175
    %s177 = smul.f32 %s176, 0.125
    %s178 = ssub.f32 %s177, %s152
    %s179 = scalar_lea.smem [#allocation5], 0
    %180 = sst [smem:[%s179]] %s178
    // Predicated region
    $region14: #{tpu_custom_call.1} parent=1 // pred_check
      _
    $region15: #{tpu_custom_call.1} parent=1 // pred_check_branch
      %182 = sbr.rel (0) target = $region17
    $region16: #{tpu_custom_call.1} parent=1 // pred_region
      %s184 = ssub.s32 16, 16
      %185 = vsyncadd [#allocation4], %s184
      %188 = dma.smem_to_hbm [#allocation5], 16, %s2, [#allocation4]
    $region17: #{tpu_custom_call.1} parent=1 // pred_fallthru
      _
    // Predicated region
    $region18: #{tpu_custom_call.1} parent=1 // pred_check
      _
    $region19: #{tpu_custom_call.1} parent=1 // pred_check_branch
      %190 = sbr.rel (0) target = $region21
    $region20: #{tpu_custom_call.1} parent=1 // pred_region
      %191 = dma.done [#allocation4], 16
    $region21: #{tpu_custom_call.1} parent=1 // pred_fallthru
      _
    %192 = sfence
    %193 = vsyncpa [#allocation3], 1
    %194 = vsyncpa [#allocation4], 1

</llo_original>
